<compile_context>
chip_gen: v5e
topology: v5e:2x2
jax: 0.10.0
libtpu: 0.0.40
codegen_flags: <defaults>
</compile_context>

<pallas_src>
import functools

import jax
import jax.numpy as jnp
from jax.experimental import pallas as pl
from jax.experimental.pallas import tpu as pltpu

LN_EPS = 1e-5


def _round_up(x, m):
    return ((x + m - 1) // m) * m


def actor_kernel(x_ref, w1_ref, ws_ref, p_ref, mu_ref, *, feature_dim, n_stack):
    """One batch-tile of the Actor forward.

    x_ref  : (TB, D_in_p)  f32   padded [obs || goal]
    w1_ref : (D_in_p, P)   bf16  trunk linear
    ws_ref : (n_stack,P,P) bf16  policy linears (last one is the output layer)
    p_ref  : (8, P)        f32   rows: b1, ln_gamma, ln_beta, policy biases...
    mu_ref : (TB, P)       f32   tanh(mu), lane-dense (real action_dim sliced outside)
    """
    x = x_ref[...]

    # trunk: Linear -> LayerNorm -> Tanh
    h = jnp.dot(x.astype(jnp.bfloat16), w1_ref[...],
                preferred_element_type=jnp.float32) + p_ref[0:1, :]
    # Padded feature columns are exactly zero, so full-width sums equal sums over
    # the real feature_dim columns; use biased variance (matches nn.LayerNorm).
    inv_f = 1.0 / feature_dim
    mean = jnp.sum(h, axis=-1, keepdims=True) * inv_f
    mean_sq = jnp.sum(h * h, axis=-1, keepdims=True) * inv_f
    var = mean_sq - mean * mean
    h = (h - mean) * jax.lax.rsqrt(var + LN_EPS)
    h = h * p_ref[1:2, :] + p_ref[2:3, :]        # gamma (zero on padding), beta
    h = jnp.tanh(h)

    # policy: (Linear -> ReLU) * (n_stack - 1) -> Linear
    for i in range(n_stack - 1):
        h = jnp.dot(h.astype(jnp.bfloat16), ws_ref[i],
                    preferred_element_type=jnp.float32) + p_ref[3 + i:4 + i, :]
        h = jnp.maximum(h, 0.0)
    mu = jnp.dot(h.astype(jnp.bfloat16), ws_ref[n_stack - 1],
                 preferred_element_type=jnp.float32) + p_ref[2 + n_stack:3 + n_stack, :]

    mu_ref[...] = jnp.tanh(mu).astype(mu_ref.dtype)


def pack_actor_params(params):
    """Pad params to lane width, stack policy weights, pack biases/LN into one tile.

    Call once; the packed dict is what actor_forward consumes.
    """
    w1 = params["w1"]
    d_in, feature_dim = w1.shape
    policy_w = params["policy_w"]
    policy_b = params["policy_b"]
    n_stack = len(policy_w)
    action_dim = policy_w[-1].shape[1]

    widths = [feature_dim] + [w.shape[1] for w in policy_w]
    P = max(_round_up(max(widths), 128), 128)
    d_in_p = _round_up(d_in, 128)

    def pad2(w, rows, cols):
        return jnp.pad(w, ((0, rows - w.shape[0]), (0, cols - w.shape[1])))

    def pad1(v):
        return jnp.pad(v, (0, P - v.shape[0]))

    w1_p = pad2(w1, d_in_p, P).astype(jnp.bfloat16)
    w_stack = jnp.stack([pad2(w, P, P).astype(jnp.bfloat16) for w in policy_w])

    rows = [pad1(params["b1"]), pad1(params["ln_g"]), pad1(params["ln_b"])]
    rows += [pad1(b) for b in policy_b]
    n_rows = _round_up(len(rows), 8)
    p_pack = jnp.zeros((n_rows, P), jnp.float32).at[: len(rows)].set(jnp.stack(rows))

    return {
        "w1": w1_p, "w_stack": w_stack, "p_pack": p_pack,
        "d_in": d_in, "d_in_p": d_in_p, "P": P,
        "feature_dim": feature_dim, "n_stack": n_stack, "action_dim": action_dim,
    }


def actor_forward(obs, goal, packed, std):
    """Returns (mu, std) of the TruncatedNormal policy distribution."""
    B = obs.shape[0]
    d_in, d_in_p = packed["d_in"], packed["d_in_p"]
    P, A = packed["P"], packed["action_dim"]
    n_stack, F = packed["n_stack"], packed["feature_dim"]
    n_rows = packed["p_pack"].shape[0]

    TB = min(256, _round_up(B, 8))          # batch tile: mult of 8, big when B is big
    B_p = _round_up(B, TB)

    og = jnp.concatenate([obs, goal], axis=-1).astype(jnp.float32)
    og = jnp.pad(og, ((0, B_p - B), (0, d_in_p - d_in)))

    kernel = functools.partial(actor_kernel, feature_dim=F, n_stack=n_stack)

    mu_padded = pl.pallas_call(
        kernel,
        out_shape=jax.ShapeDtypeStruct((B_p, P), jnp.float32),
        grid=(B_p // TB,),
        in_specs=[
            pl.BlockSpec((TB, d_in_p), lambda i: (i, 0)),          # obs||goal tile
            pl.BlockSpec((d_in_p, P), lambda i: (0, 0)),           # w1 (resident)
            pl.BlockSpec((n_stack, P, P), lambda i: (0, 0, 0)),    # policy weights
            pl.BlockSpec((n_rows, P), lambda i: (0, 0)),           # packed biases/LN
        ],
        out_specs=pl.BlockSpec((TB, P), lambda i: (i, 0)),
        compiler_params=pltpu.CompilerParams(
            dimension_semantics=("parallel",)),
    )(og, packed["w1"], packed["w_stack"], packed["p_pack"])

    mu = mu_padded[:B, :A]
    std_arr = jnp.full((B, A), std, jnp.float32)
    # TODO(synk): the TruncatedNormal distribution object (sampling / clipping) has
    # no Pallas equivalent; its defining parameters (mu, std) are returned instead.
    return mu, std_arr


def init_params(key, obs_dim, goal_dim, action_dim, feature_dim, hidden_dim,
                obs_type="pixels"):
    """Deterministic synthetic init mirroring the module structure (not a checkpoint)."""
    feature_dim = feature_dim if obs_type == "pixels" else hidden_dim
    in_dim = obs_dim + goal_dim
    n_hidden = 3 if obs_type == "pixels" else 2
    layer_out_dims = [hidden_dim] * n_hidden + [action_dim]

    ks = jax.random.split(key, 1 + len(layer_out_dims))

    def dense(k, fi, fo):
        w = jax.random.normal(k, (fi, fo), jnp.float32) / jnp.sqrt(fi)
        return w, jnp.zeros((fo,), jnp.float32)

    w1, b1 = dense(ks[0], in_dim, feature_dim)
    policy_w, policy_b = [], []
    prev = feature_dim
    for idx, d in enumerate(layer_out_dims):
        w, b = dense(ks[1 + idx], prev, d)
        policy_w.append(w)
        policy_b.append(b)
        prev = d

    return {
        "w1": w1, "b1": b1,
        "ln_g": jnp.ones((feature_dim,), jnp.float32),
        "ln_b": jnp.zeros((feature_dim,), jnp.float32),
        "policy_w": policy_w, "policy_b": policy_b,
    }


def reference_forward(obs, goal, params):
    """Pure-JAX reference using the same bf16 weight / f32 accumulate precision."""
    og = jnp.concatenate([obs, goal], axis=-1)
    w1 = params["w1"].astype(jnp.bfloat16)
    h = jnp.dot(og.astype(jnp.bfloat16), w1,
                preferred_element_type=jnp.float32) + params["b1"]
    m = h.mean(-1, keepdims=True)
    v = ((h - m) ** 2).mean(-1, keepdims=True)
    h = (h - m) * jax.lax.rsqrt(v + LN_EPS) * params["ln_g"] + params["ln_b"]
    h = jnp.tanh(h)
    ws, bs = params["policy_w"], params["policy_b"]
    for w, b in zip(ws[:-1], bs[:-1]):
        h = jnp.maximum(
            jnp.dot(h.astype(jnp.bfloat16), w.astype(jnp.bfloat16),
                    preferred_element_type=jnp.float32) + b, 0.0)
    mu = jnp.dot(h.astype(jnp.bfloat16), ws[-1].astype(jnp.bfloat16),
                 preferred_element_type=jnp.float32) + bs[-1]
    return jnp.tanh(mu)


if __name__ == "__main__":
    # Small shapes consistent with Actor(obs_type='pixels', ...)
    batch = 4
    obs_dim = 16
    goal_dim = 8
    feature_dim = 32
    hidden_dim = 64
    action_dim = 6
    std_value = 0.2

    key = jax.random.PRNGKey(0)
    k_obs, k_goal, k_par = jax.random.split(key, 3)
    obs = jax.random.normal(k_obs, (batch, obs_dim), jnp.float32)
    goal = jax.random.normal(k_goal, (batch, goal_dim), jnp.float32)

    params = init_params(k_par, obs_dim, goal_dim, action_dim, feature_dim,
                         hidden_dim, obs_type="pixels")
    packed = pack_actor_params(params)

    mu, std = actor_forward(obs, goal, packed, std_value)
    jax.block_until_ready((mu, std))

    mu_ref = reference_forward(obs, goal, params)
    assert mu.shape == (batch, action_dim), "mu shape mismatch"
    assert jnp.allclose(mu, mu_ref, atol=1e-2), "mu mismatch"
    assert jnp.allclose(std, jnp.full((batch, action_dim), std_value)), "std mismatch"

    print("KERNEL_OK")
</pallas_src>

<mosaic_0001>
module attributes {stable_mosaic.version = 11 : i64} {
  func.func @actor_kernel(%arg0: i32, %arg1: memref<8x128xf32, #tpu.memory_space<vmem>>, %arg2: memref<128x128xbf16, #tpu.memory_space<vmem>>, %arg3: memref<4x128x128xbf16, #tpu.memory_space<vmem>>, %arg4: memref<8x128xf32, #tpu.memory_space<vmem>>, %arg5: memref<8x128xf32, #tpu.memory_space<vmem>>) attributes {dimension_semantics = [#tpu.dimension_semantics<parallel>], iteration_bounds = array<i64: 1>, scalar_prefetch = 0 : i64, scratch_operands = 0 : i64, tpu.core_type = #tpu.core_type<tc>, window_params = [{transform_indices = @transform_0, window_bounds = array<i64: 8, 128>}, {pipeline_mode = #tpu.pipeline_mode<synchronous>, transform_indices = @transform_1, window_bounds = array<i64: 128, 128>}, {pipeline_mode = #tpu.pipeline_mode<synchronous>, transform_indices = @transform_2, window_bounds = array<i64: 4, 128, 128>}, {pipeline_mode = #tpu.pipeline_mode<synchronous>, transform_indices = @transform_3, window_bounds = array<i64: 8, 128>}, {transform_indices = @transform_4, window_bounds = array<i64: 8, 128>}]} {
    %c0 = arith.constant 0 : index
    %c0_0 = arith.constant 0 : index
    %0 = vector.load %arg1[%c0, %c0_0] : memref<8x128xf32, #tpu.memory_space<vmem>>, vector<8x128xf32>
    %1 = arith.truncf %0 : vector<8x128xf32> to vector<8x128xbf16>
    %c0_1 = arith.constant 0 : index
    %c0_2 = arith.constant 0 : index
    %2 = vector.load %arg2[%c0_1, %c0_2] : memref<128x128xbf16, #tpu.memory_space<vmem>>, vector<128x128xbf16>
    %cst = arith.constant dense<0.000000e+00> : vector<8x128xf32>
    %3 = tpu.matmul %1, %2, %cst {dimension_numbers = #tpu.dot_dimension_numbers<[1], [0], [0], [1], [0, 0, 1, 1], [], []>} : vector<8x128xbf16>, vector<128x128xbf16>, vector<8x128xf32> -> vector<8x128xf32>
    %c0_3 = arith.constant 0 : index
    %c0_4 = arith.constant 0 : index
    %4 = vector.load %arg4[%c0_3, %c0_4] : memref<8x128xf32, #tpu.memory_space<vmem>>, vector<1x128xf32>
    %5 = vector.broadcast %4 : vector<1x128xf32> to vector<8x128xf32>
    %6 = arith.addf %3, %5 : vector<8x128xf32>
    %cst_5 = arith.constant dense<0.000000e+00> : vector<8xf32>
    %7 = vector.multi_reduction <add>, %6, %cst_5 [1] : vector<8x128xf32> to vector<8xf32>
    %8 = vector.shape_cast %7 : vector<8xf32> to vector<8x1xf32>
    %cst_6 = arith.constant 3.125000e-02 : f32
    %9 = vector.broadcast %cst_6 : f32 to vector<8x1xf32>
    %10 = arith.mulf %8, %9 : vector<8x1xf32>
    %11 = arith.mulf %6, %6 : vector<8x128xf32>
    %cst_7 = arith.constant dense<0.000000e+00> : vector<8xf32>
    %12 = vector.multi_reduction <add>, %11, %cst_7 [1] : vector<8x128xf32> to vector<8xf32>
    %13 = vector.shape_cast %12 : vector<8xf32> to vector<8x1xf32>
    %cst_8 = arith.constant 3.125000e-02 : f32
    %14 = vector.broadcast %cst_8 : f32 to vector<8x1xf32>
    %15 = arith.mulf %13, %14 : vector<8x1xf32>
    %16 = arith.mulf %10, %10 : vector<8x1xf32>
    %17 = arith.subf %15, %16 : vector<8x1xf32>
    %18 = vector.broadcast %10 : vector<8x1xf32> to vector<8x128xf32>
    %19 = arith.subf %6, %18 : vector<8x128xf32>
    %cst_9 = arith.constant 9.99999974E-6 : f32
    %20 = vector.broadcast %cst_9 : f32 to vector<8x1xf32>
    %21 = arith.addf %17, %20 : vector<8x1xf32>
    %22 = math.rsqrt %21 : vector<8x1xf32>
    %23 = vector.broadcast %22 : vector<8x1xf32> to vector<8x128xf32>
    %24 = arith.mulf %19, %23 : vector<8x128xf32>
    %c1 = arith.constant 1 : index
    %c0_10 = arith.constant 0 : index
    %25 = vector.load %arg4[%c1, %c0_10] : memref<8x128xf32, #tpu.memory_space<vmem>>, vector<1x128xf32>
    %26 = vector.broadcast %25 : vector<1x128xf32> to vector<8x128xf32>
    %27 = arith.mulf %24, %26 : vector<8x128xf32>
    %c2 = arith.constant 2 : index
    %c0_11 = arith.constant 0 : index
    %28 = vector.load %arg4[%c2, %c0_11] : memref<8x128xf32, #tpu.memory_space<vmem>>, vector<1x128xf32>
    %29 = vector.broadcast %28 : vector<1x128xf32> to vector<8x128xf32>
    %30 = arith.addf %27, %29 : vector<8x128xf32>
    %31 = math.tanh %30 : vector<8x128xf32>
    %32 = arith.truncf %31 : vector<8x128xf32> to vector<8x128xbf16>
    %c0_12 = arith.constant 0 : index
    %c0_13 = arith.constant 0 : index
    %c0_14 = arith.constant 0 : index
    %33 = vector.load %arg3[%c0_12, %c0_13, %c0_14] : memref<4x128x128xbf16, #tpu.memory_space<vmem>>, vector<1x128x128xbf16>
    %34 = vector.shape_cast %33 : vector<1x128x128xbf16> to vector<128x128xbf16>
    %cst_15 = arith.constant dense<0.000000e+00> : vector<8x128xf32>
    %35 = tpu.matmul %32, %34, %cst_15 {dimension_numbers = #tpu.dot_dimension_numbers<[1], [0], [0], [1], [0, 0, 1, 1], [], []>} : vector<8x128xbf16>, vector<128x128xbf16>, vector<8x128xf32> -> vector<8x128xf32>
    %c3 = arith.constant 3 : index
    %c0_16 = arith.constant 0 : index
    %36 = vector.load %arg4[%c3, %c0_16] : memref<8x128xf32, #tpu.memory_space<vmem>>, vector<1x128xf32>
    %37 = vector.broadcast %36 : vector<1x128xf32> to vector<8x128xf32>
    %38 = arith.addf %35, %37 : vector<8x128xf32>
    %cst_17 = arith.constant 0.000000e+00 : f32
    %39 = vector.broadcast %cst_17 : f32 to vector<8x128xf32>
    %40 = arith.maximumf %38, %39 : vector<8x128xf32>
    %41 = arith.truncf %40 : vector<8x128xf32> to vector<8x128xbf16>
    %c1_18 = arith.constant 1 : index
    %c0_19 = arith.constant 0 : index
    %c0_20 = arith.constant 0 : index
    %42 = vector.load %arg3[%c1_18, %c0_19, %c0_20] : memref<4x128x128xbf16, #tpu.memory_space<vmem>>, vector<1x128x128xbf16>
    %43 = vector.shape_cast %42 : vector<1x128x128xbf16> to vector<128x128xbf16>
    %cst_21 = arith.constant dense<0.000000e+00> : vector<8x128xf32>
    %44 = tpu.matmul %41, %43, %cst_21 {dimension_numbers = #tpu.dot_dimension_numbers<[1], [0], [0], [1], [0, 0, 1, 1], [], []>} : vector<8x128xbf16>, vector<128x128xbf16>, vector<8x128xf32> -> vector<8x128xf32>
    %c4 = arith.constant 4 : index
    %c0_22 = arith.constant 0 : index
    %45 = vector.load %arg4[%c4, %c0_22] : memref<8x128xf32, #tpu.memory_space<vmem>>, vector<1x128xf32>
    %46 = vector.broadcast %45 : vector<1x128xf32> to vector<8x128xf32>
    %47 = arith.addf %44, %46 : vector<8x128xf32>
    %cst_23 = arith.constant 0.000000e+00 : f32
    %48 = vector.broadcast %cst_23 : f32 to vector<8x128xf32>
    %49 = arith.maximumf %47, %48 : vector<8x128xf32>
    %50 = arith.truncf %49 : vector<8x128xf32> to vector<8x128xbf16>
    %c2_24 = arith.constant 2 : index
    %c0_25 = arith.constant 0 : index
    %c0_26 = arith.constant 0 : index
    %51 = vector.load %arg3[%c2_24, %c0_25, %c0_26] : memref<4x128x128xbf16, #tpu.memory_space<vmem>>, vector<1x128x128xbf16>
    %52 = vector.shape_cast %51 : vector<1x128x128xbf16> to vector<128x128xbf16>
    %cst_27 = arith.constant dense<0.000000e+00> : vector<8x128xf32>
    %53 = tpu.matmul %50, %52, %cst_27 {dimension_numbers = #tpu.dot_dimension_numbers<[1], [0], [0], [1], [0, 0, 1, 1], [], []>} : vector<8x128xbf16>, vector<128x128xbf16>, vector<8x128xf32> -> vector<8x128xf32>
    %c5 = arith.constant 5 : index
    %c0_28 = arith.constant 0 : index
    %54 = vector.load %arg4[%c5, %c0_28] : memref<8x128xf32, #tpu.memory_space<vmem>>, vector<1x128xf32>
    %55 = vector.broadcast %54 : vector<1x128xf32> to vector<8x128xf32>
    %56 = arith.addf %53, %55 : vector<8x128xf32>
    %cst_29 = arith.constant 0.000000e+00 : f32
    %57 = vector.broadcast %cst_29 : f32 to vector<8x128xf32>
    %58 = arith.maximumf %56, %57 : vector<8x128xf32>
    %59 = arith.truncf %58 : vector<8x128xf32> to vector<8x128xbf16>
    %c3_30 = arith.constant 3 : index
    %c0_31 = arith.constant 0 : index
    %c0_32 = arith.constant 0 : index
    %60 = vector.load %arg3[%c3_30, %c0_31, %c0_32] : memref<4x128x128xbf16, #tpu.memory_space<vmem>>, vector<1x128x128xbf16>
    %61 = vector.shape_cast %60 : vector<1x128x128xbf16> to vector<128x128xbf16>
    %cst_33 = arith.constant dense<0.000000e+00> : vector<8x128xf32>
    %62 = tpu.matmul %59, %61, %cst_33 {dimension_numbers = #tpu.dot_dimension_numbers<[1], [0], [0], [1], [0, 0, 1, 1], [], []>} : vector<8x128xbf16>, vector<128x128xbf16>, vector<8x128xf32> -> vector<8x128xf32>
    %c6 = arith.constant 6 : index
    %c0_34 = arith.constant 0 : index
    %63 = vector.load %arg4[%c6, %c0_34] : memref<8x128xf32, #tpu.memory_space<vmem>>, vector<1x128xf32>
    %64 = vector.broadcast %63 : vector<1x128xf32> to vector<8x128xf32>
    %65 = arith.addf %62, %64 : vector<8x128xf32>
    %66 = math.tanh %65 : vector<8x128xf32>
    %c0_35 = arith.constant 0 : index
    %c0_36 = arith.constant 0 : index
    %67 = vector.load %arg5[%c0_35, %c0_36] : memref<8x128xf32, #tpu.memory_space<vmem>>, vector<8x128xf32>
    tpu.vector_store %arg5[%c0_35, %c0_36], %66 {strides = array<i32>} : memref<8x128xf32, #tpu.memory_space<vmem>>, vector<8x128xf32>,
    return
  }
  func.func @transform_0(%arg0: i32) -> (i32, i32) {
    %c0_i32 = arith.constant 0 : i32
    %c0_i32_0 = arith.constant 0 : i32
    return %arg0, %c0_i32 : i32, i32
  }
  func.func @transform_1(%arg0: i32) -> (i32, i32) {
    %c0_i32 = arith.constant 0 : i32
    %c0_i32_0 = arith.constant 0 : i32
    %c0_i32_1 = arith.constant 0 : i32
    return %c0_i32, %c0_i32_0 : i32, i32
  }
  func.func @transform_2(%arg0: i32) -> (i32, i32, i32) {
    %c0_i32 = arith.constant 0 : i32
    %c0_i32_0 = arith.constant 0 : i32
    %c0_i32_1 = arith.constant 0 : i32
    %c0_i32_2 = arith.constant 0 : i32
    return %c0_i32, %c0_i32_0, %c0_i32_1 : i32, i32, i32
  }
  func.func @transform_3(%arg0: i32) -> (i32, i32) {
    %c0_i32 = arith.constant 0 : i32
    %c0_i32_0 = arith.constant 0 : i32
    %c0_i32_1 = arith.constant 0 : i32
    return %c0_i32, %c0_i32_0 : i32, i32
  }
  func.func @transform_4(%arg0: i32) -> (i32, i32) {
    %c0_i32 = arith.constant 0 : i32
    %c0_i32_0 = arith.constant 0 : i32
    return %arg0, %c0_i32 : i32, i32
  }
}

</mosaic_0001>

<llo_original>
// kernel: tpu_custom_call.1
$region0: #{tpu_custom_call.1}
  #allocation0 [shape = 'u32[]', space=smem, size = 0x4, offset = 0x4, fixed_abs, tag = 'smem constant byte address 0x4 - core index']
  #allocation1 [shape = 'u32[72,128]{1,0:T(1,128)}', space=vmem, size = 0x9000, scoped, tag = 'internal scratch']
  %s0 = inlined_call_operand.hbm [shape: f32[8,128], index: 0, kind: input, shape index: {}]
  %s1 = inlined_call_operand.hbm [shape: bf16[128,128], index: 1, kind: input, shape index: {}]
  %s2 = inlined_call_operand.hbm [shape: bf16[4,128,128], index: 2, kind: input, shape index: {}]
  %s3 = inlined_call_operand.hbm [shape: f32[8,128], index: 3, kind: input, shape index: {}]
  %s4 = inlined_call_operand.hbm [shape: f32[8,128], index: 4, kind: output, shape index: {}]
  %s5 = sld [smem:[#allocation0]]
  $region42: #{tpu_custom_call.1} parent=0
    _
  %s7 = ssub.s32 1, %s5
  %s8 = scalar_select 0, %s7, %s5
  $region1: #{tpu_custom_call.1} parent=0
    #allocation2 [shape = 'u8[4096]{0}', space=vmem, size = 0x1000, scoped, tag = 'input window, operand 0, single buffered']
    #allocation3 [shape = 's32[1]{0}', space=sflag, size = 0x4, scoped, tag = 'scoped memory for tpu_custom_call.1']
    #allocation4 [shape = 's32[1]{0}', space=sflag, size = 0x4, scoped, tag = 'scoped memory for tpu_custom_call.1']
    #allocation5 [shape = 'u8[32768]{0}', space=vmem, size = 0x8000, scoped, tag = 'input window, operand 1, single buffered']
    #allocation6 [shape = 's32[1]{0}', space=sflag, size = 0x4, scoped, tag = 'scoped memory for tpu_custom_call.1']
    #allocation7 [shape = 'u8[131072]{0}', space=vmem, size = 0x20000, scoped, tag = 'input window, operand 2, single buffered']
    #allocation8 [shape = 'u8[4096]{0}', space=vmem, size = 0x1000, scoped, tag = 'input window, operand 3, single buffered']
    #allocation9 [shape = 's32[1]{0}', space=sflag, size = 0x4, scoped, tag = 'scoped memory for tpu_custom_call.1']
    #allocation10 [shape = 'u8[4096]{0}', space=vmem, size = 0x1000, scoped, tag = 'output window, operand 0, single buffered']
    %9 = vsyncpa [#allocation3], 0
    %10 = vsyncpa [#allocation6], 0
    %11 = vsyncpa [#allocation9], 0
    %12 = vsyncpa [#allocation4], 0
    // Predicated region
    $region2: #{tpu_custom_call.1} parent=1 // pred_check
      _
    $region3: #{tpu_custom_call.1} parent=1 // pred_check_branch
      %14 = sbr.rel (0) target = $region5
    $region4: #{tpu_custom_call.1} parent=1 // pred_region
      %16 = vsyncadd [#allocation3], 0
      %s18 = sshll.u32 %s0, 4
      %s19 = int_to_ptr.hbm [resolvable:$true] %s18
      %s20 = sshll.u32 [#allocation2], 4
      %s21 = int_to_ptr.vmem [resolvable:$true] %s20
      %23 = dma.hbm_to_vmem [thread:$0]  %s19, 128, %s21, [#allocation3]
    $region5: #{tpu_custom_call.1} parent=1 // pred_fallthru
      _
    // Predicated region
    $region6: #{tpu_custom_call.1} parent=1 // pred_check
      _
    $region7: #{tpu_custom_call.1} parent=1 // pred_check_branch
      %25 = sbr.rel (0) target = $region9
    $region8: #{tpu_custom_call.1} parent=1 // pred_region
      %27 = vsyncadd [#allocation6], 0
      %s28 = sshll.u32 %s1, 4
      %s29 = int_to_ptr.hbm [resolvable:$true] %s28
      %s30 = sshll.u32 [#allocation5], 4
      %s31 = int_to_ptr.vmem [resolvable:$true] %s30
      %36 = dma.hbm_to_vmem [thread:$0]  %s29, 1024, %s31, [#allocation6], 64, 64, 4
    $region9: #{tpu_custom_call.1} parent=1 // pred_fallthru
      _
    // Predicated region
    $region10: #{tpu_custom_call.1} parent=1 // pred_check
      _
    $region11: #{tpu_custom_call.1} parent=1 // pred_check_branch
      %38 = sbr.rel (0) target = $region13
    $region12: #{tpu_custom_call.1} parent=1 // pred_region
      %40 = vsyncadd [#allocation6], 0
      %s41 = sshll.u32 %s2, 4
      %s42 = int_to_ptr.hbm [resolvable:$true] %s41
      %s43 = sshll.u32 [#allocation7], 4
      %s44 = int_to_ptr.vmem [resolvable:$true] %s43
      %49 = dma.hbm_to_vmem [thread:$0]  %s42, 4096, %s44, [#allocation6], 64, 64, 4
    $region13: #{tpu_custom_call.1} parent=1 // pred_fallthru
      _
    // Predicated region
    $region14: #{tpu_custom_call.1} parent=1 // pred_check
      _
    $region15: #{tpu_custom_call.1} parent=1 // pred_check_branch
      %51 = sbr.rel (0) target = $region17
    $region16: #{tpu_custom_call.1} parent=1 // pred_region
      %53 = vsyncadd [#allocation9], 0
      %s55 = sshll.u32 %s3, 4
      %s56 = int_to_ptr.hbm [resolvable:$true] %s55
      %s57 = sshll.u32 [#allocation8], 4
      %s58 = int_to_ptr.vmem [resolvable:$true] %s57
      %60 = dma.hbm_to_vmem [thread:$0]  %s56, 128, %s58, [#allocation9]
    $region17: #{tpu_custom_call.1} parent=1 // pred_fallthru
      _
    // Predicated region
    $region18: #{tpu_custom_call.1} parent=1 // pred_check
      _
    $region19: #{tpu_custom_call.1} parent=1 // pred_check_branch
      %62 = sbr.rel (0) target = $region21
    $region20: #{tpu_custom_call.1} parent=1 // pred_region
      %64 = dma.done [#allocation3], 128
    $region21: #{tpu_custom_call.1} parent=1 // pred_fallthru
      _
    // Predicated region
    $region22: #{tpu_custom_call.1} parent=1 // pred_check
      _
    $region23: #{tpu_custom_call.1} parent=1 // pred_check_branch
      %66 = sbr.rel (0) target = $region25
    $region24: #{tpu_custom_call.1} parent=1 // pred_region
      %68 = dma.done [#allocation6], 1024
    $region25: #{tpu_custom_call.1} parent=1 // pred_fallthru
      _
    // Predicated region
    $region26: #{tpu_custom_call.1} parent=1 // pred_check
      _
    $region27: #{tpu_custom_call.1} parent=1 // pred_check_branch
      %70 = sbr.rel (0) target = $region29
    $region28: #{tpu_custom_call.1} parent=1 // pred_region
      %72 = dma.done [#allocation6], 4096
    $region29: #{tpu_custom_call.1} parent=1 // pred_fallthru
      _
    // Predicated region
    $region30: #{tpu_custom_call.1} parent=1 // pred_check
      _
    $region31: #{tpu_custom_call.1} parent=1 // pred_check_branch
      %74 = sbr.rel (0) target = $region33
    $region32: #{tpu_custom_call.1} parent=1 // pred_region
      %76 = dma.done [#allocation9], 128
    $region33: #{tpu_custom_call.1} parent=1 // pred_fallthru
      _
    %v77 = vld [vmem:[#allocation2] sm:$0xff]
    %v78 = vpack.c.bf16 %v77, %v77
    %v79 = vld [vmem:[#allocation5] sm:$0xf]
    %v80 = vld [vmem:[#allocation5 + $0x4] sm:$0xf]
    %v81 = vld [vmem:[#allocation5 + $0x8] sm:$0xf]
    %v82 = vld [vmem:[#allocation5 + $0xc] sm:$0xf]
    %v83 = vld [vmem:[#allocation5 + $0x10] sm:$0xf]
    %v84 = vld [vmem:[#allocation5 + $0x14] sm:$0xf]
    %v85 = vld [vmem:[#allocation5 + $0x18] sm:$0xf]
    %v86 = vld [vmem:[#allocation5 + $0x1c] sm:$0xf]
    %v87 = vld [vmem:[#allocation5 + $0x20] sm:$0xf]
    %v88 = vld [vmem:[#allocation5 + $0x24] sm:$0xf]
    %v89 = vld [vmem:[#allocation5 + $0x28] sm:$0xf]
    %v90 = vld [vmem:[#allocation5 + $0x2c] sm:$0xf]
    %v91 = vld [vmem:[#allocation5 + $0x30] sm:$0xf]
    %v92 = vld [vmem:[#allocation5 + $0x34] sm:$0xf]
    %v93 = vld [vmem:[#allocation5 + $0x38] sm:$0xf]
    %v94 = vld [vmem:[#allocation5 + $0x3c] sm:$0xf]
    %v95 = vld [vmem:[#allocation8] sm:$0x1]
    %v96 = vperm.slane %v95, 0
    %v113 = vunpack.c.l.b16 %v79
    %v114 = vunpack.c.l.b16 %v80
    %v115 = vunpack.c.l.b16 %v81
    %v116 = vunpack.c.l.b16 %v82
    %v117 = vunpack.c.l.b16 %v83
    %v118 = vunpack.c.l.b16 %v84
    %v119 = vunpack.c.l.b16 %v85
    %v120 = vunpack.c.l.b16 %v86
    %v121 = vunpack.c.l.b16 %v87
    %v122 = vunpack.c.l.b16 %v88
    %v123 = vunpack.c.l.b16 %v89
    %v124 = vunpack.c.l.b16 %v90
    %v125 = vunpack.c.l.b16 %v91
    %v126 = vunpack.c.l.b16 %v92
    %v127 = vunpack.c.l.b16 %v93
    %v128 = vunpack.c.l.b16 %v94
    %v129 = vpack.c.b16 %v114, %v113
    %v130 = vpack.c.b16 %v116, %v115
    %v131 = vpack.c.b16 %v118, %v117
    %v132 = vpack.c.b16 %v120, %v119
    %v133 = vpack.c.b16 %v122, %v121
    %v134 = vpack.c.b16 %v124, %v123
    %v135 = vpack.c.b16 %v126, %v125
    %v136 = vpack.c.b16 %v128, %v127
    %145 = vmatpush.bf16.msra.mxu0 %v136
    %146 = vmatpush.bf16.msra.mxu0 %v135
    %147 = vmatpush.bf16.msra.mxu0 %v134
    %148 = vmatpush.bf16.msra.mxu0 %v133
    %149 = vmatpush.bf16.msra.mxu0 %v132
    %150 = vmatpush.bf16.msra.mxu0 %v131
    %151 = vmatpush.bf16.msra.mxu0 %v130
    %152 = vmatpush.bf16.msra.mxu0 %v129
    %153 = vmatmul.bf16.gmra.mxu0 %v78
    %v154 = vpop.f32.mrf.mxu0
    %v155 = vadd.f32 %v96, %v154
    %v156 = vpop.f32.mrf.mxu0
    %157 = vdwg.mxu0
    %158 = vadd.xlane.f32.xlu0 %v155
    %v159 = vpop.xlane.xlu0 %158
    %v160 = vmul.f32 %v159, 0.03125
    %v161 = vmul.f32 %v155, %v155
    %162 = vadd.xlane.f32.xlu0 %v161
    %v163 = vpop.xlane.xlu0 %162
    %v164 = vmul.f32 %v163, 0.03125
    %v165 = vmul.f32 %v160, %v160
    %v166 = vsub.f32 %v164, %v165
    %v167 = vsub.f32 %v155, %v160
    %v168 = vadd.f32 %v166, 1e-05
    %v169 = vrsqrt.pop %v168
    %v170 = vmul.f32 %v169, %v168
    %v171 = vmul.f32 %v170, %v169
    %v172 = vmul.f32 0.5, %v171
    %v173 = vsub.f32 1.5, %v172
    %v174 = vmul.f32 %v169, %v173
    %vm175 = vweird.f32 %v168
    %vm176 = vweird.f32 %v169
    %vm177 = vmor %vm175, %vm176
    %v178 = vsel %vm177, %v169, %v174
    %v179 = vmul.f32 %v167, %v178
    %v180 = vld [vmem:[#allocation8 + $0x1] sm:$0x1]
    %v181 = vperm.slane %v180, 0
    %v182 = vmul.f32 %v179, %v181
    %v183 = vld [vmem:[#allocation8 + $0x2] sm:$0x1]
    %v184 = vperm.slane %v183, 0
    %v185 = vadd.f32 %v182, %v184
    %v186 = vtanh.pop %v185
    %v187 = vpack.c.bf16 %v186, %v186
    %v188 = vld [vmem:[#allocation7] sm:$0xf]
    %v189 = vld [vmem:[#allocation7 + $0x4] sm:$0xf]
    %v190 = vld [vmem:[#allocation7 + $0x8] sm:$0xf]
    %v191 = vld [vmem:[#allocation7 + $0xc] sm:$0xf]
    %v192 = vld [vmem:[#allocation7 + $0x10] sm:$0xf]
    %v193 = vld [vmem:[#allocation7 + $0x14] sm:$0xf]
    %v194 = vld [vmem:[#allocation7 + $0x18] sm:$0xf]
    %v195 = vld [vmem:[#allocation7 + $0x1c] sm:$0xf]
    %v196 = vld [vmem:[#allocation7 + $0x20] sm:$0xf]
    %v197 = vld [vmem:[#allocation7 + $0x24] sm:$0xf]
    %v198 = vld [vmem:[#allocation7 + $0x28] sm:$0xf]
    %v199 = vld [vmem:[#allocation7 + $0x2c] sm:$0xf]
    %v200 = vld [vmem:[#allocation7 + $0x30] sm:$0xf]
    %v201 = vld [vmem:[#allocation7 + $0x34] sm:$0xf]
    %v202 = vld [vmem:[#allocation7 + $0x38] sm:$0xf]
    %v203 = vld [vmem:[#allocation7 + $0x3c] sm:$0xf]
    %v204 = vld [vmem:[#allocation8 + $0x3] sm:$0x1]
    %v205 = vperm.slane %v204, 0
    %v222 = vunpack.c.l.b16 %v188
    %v223 = vunpack.c.l.b16 %v189
    %v224 = vunpack.c.l.b16 %v190
    %v225 = vunpack.c.l.b16 %v191
    %v226 = vunpack.c.l.b16 %v192
    %v227 = vunpack.c.l.b16 %v193
    %v228 = vunpack.c.l.b16 %v194
    %v229 = vunpack.c.l.b16 %v195
    %v230 = vunpack.c.l.b16 %v196
    %v231 = vunpack.c.l.b16 %v197
    %v232 = vunpack.c.l.b16 %v198
    %v233 = vunpack.c.l.b16 %v199
    %v234 = vunpack.c.l.b16 %v200
    %v235 = vunpack.c.l.b16 %v201
    %v236 = vunpack.c.l.b16 %v202
    %v237 = vunpack.c.l.b16 %v203
    %v238 = vpack.c.b16 %v223, %v222
    %v239 = vpack.c.b16 %v225, %v224
    %v240 = vpack.c.b16 %v227, %v226
    %v241 = vpack.c.b16 %v229, %v228
    %v242 = vpack.c.b16 %v231, %v230
    %v243 = vpack.c.b16 %v233, %v232
    %v244 = vpack.c.b16 %v235, %v234
    %v245 = vpack.c.b16 %v237, %v236
    %254 = vmatpush.bf16.msra.mxu0 %v245
    %255 = vmatpush.bf16.msra.mxu0 %v244
    %256 = vmatpush.bf16.msra.mxu0 %v243
    %257 = vmatpush.bf16.msra.mxu0 %v242
    %258 = vmatpush.bf16.msra.mxu0 %v241
    %259 = vmatpush.bf16.msra.mxu0 %v240
    %260 = vmatpush.bf16.msra.mxu0 %v239
    %261 = vmatpush.bf16.msra.mxu0 %v238
    %262 = vmatmul.bf16.gmra.mxu0 %v187
    %v263 = vpop.f32.mrf.mxu0
    %v264 = vadd.f32 %v205, %v263
    %v265 = vpop.f32.mrf.mxu0
    %266 = vdwg.mxu0
    %v267 = vmax.f32 %v264, 0.0
    %v268 = vpack.c.bf16 %v267, %v267
    %s269 = scalar_lea.vmem [#allocation7], 64
    %v270 = vld [vmem:[%s269] sm:$0xf]
    %v271 = vld [vmem:[%s269 + $0x4] sm:$0xf]
    %v272 = vld [vmem:[%s269 + $0x8] sm:$0xf]
    %v273 = vld [vmem:[%s269 + $0xc] sm:$0xf]
    %v274 = vld [vmem:[%s269 + $0x10] sm:$0xf]
    %v275 = vld [vmem:[%s269 + $0x14] sm:$0xf]
    %v276 = vld [vmem:[%s269 + $0x18] sm:$0xf]
    %v277 = vld [vmem:[%s269 + $0x1c] sm:$0xf]
    %v278 = vld [vmem:[%s269 + $0x20] sm:$0xf]
    %v279 = vld [vmem:[%s269 + $0x24] sm:$0xf]
    %v280 = vld [vmem:[%s269 + $0x28] sm:$0xf]
    %v281 = vld [vmem:[%s269 + $0x2c] sm:$0xf]
    %v282 = vld [vmem:[%s269 + $0x30] sm:$0xf]
    %v283 = vld [vmem:[%s269 + $0x34] sm:$0xf]
    %v284 = vld [vmem:[%s269 + $0x38] sm:$0xf]
    %v285 = vld [vmem:[%s269 + $0x3c] sm:$0xf]
    %v286 = vld [vmem:[#allocation8 + $0x4] sm:$0x1]
    %v287 = vperm.slane %v286, 0
    %v304 = vunpack.c.l.b16 %v270
    %v305 = vunpack.c.l.b16 %v271
    %v306 = vunpack.c.l.b16 %v272
    %v307 = vunpack.c.l.b16 %v273
    %v308 = vunpack.c.l.b16 %v274
    %v309 = vunpack.c.l.b16 %v275
    %v310 = vunpack.c.l.b16 %v276
    %v311 = vunpack.c.l.b16 %v277
    %v312 = vunpack.c.l.b16 %v278
    %v313 = vunpack.c.l.b16 %v279
    %v314 = vunpack.c.l.b16 %v280
    %v315 = vunpack.c.l.b16 %v281
    %v316 = vunpack.c.l.b16 %v282
    %v317 = vunpack.c.l.b16 %v283
    %v318 = vunpack.c.l.b16 %v284
    %v319 = vunpack.c.l.b16 %v285
    %v320 = vpack.c.b16 %v305, %v304
    %v321 = vpack.c.b16 %v307, %v306
    %v322 = vpack.c.b16 %v309, %v308
    %v323 = vpack.c.b16 %v311, %v310
    %v324 = vpack.c.b16 %v313, %v312
    %v325 = vpack.c.b16 %v315, %v314
    %v326 = vpack.c.b16 %v317, %v316
    %v327 = vpack.c.b16 %v319, %v318
    %336 = vmatpush.bf16.msra.mxu0 %v327
    %337 = vmatpush.bf16.msra.mxu0 %v326
    %338 = vmatpush.bf16.msra.mxu0 %v325
    %339 = vmatpush.bf16.msra.mxu0 %v324
    %340 = vmatpush.bf16.msra.mxu0 %v323
    %341 = vmatpush.bf16.msra.mxu0 %v322
    %342 = vmatpush.bf16.msra.mxu0 %v321
    %343 = vmatpush.bf16.msra.mxu0 %v320
    %344 = vmatmul.bf16.gmra.mxu0 %v268
    %v345 = vpop.f32.mrf.mxu0
    %v346 = vadd.f32 %v287, %v345
    %v347 = vpop.f32.mrf.mxu0
    %348 = vdwg.mxu0
    %v349 = vmax.f32 %v346, 0.0
    %v350 = vpack.c.bf16 %v349, %v349
    %s351 = scalar_lea.vmem [#allocation7], 128
    %v352 = vld [vmem:[%s351] sm:$0xf]
    %v353 = vld [vmem:[%s351 + $0x4] sm:$0xf]
    %v354 = vld [vmem:[%s351 + $0x8] sm:$0xf]
    %v355 = vld [vmem:[%s351 + $0xc] sm:$0xf]
    %v356 = vld [vmem:[%s351 + $0x10] sm:$0xf]
    %v357 = vld [vmem:[%s351 + $0x14] sm:$0xf]
    %v358 = vld [vmem:[%s351 + $0x18] sm:$0xf]
    %v359 = vld [vmem:[%s351 + $0x1c] sm:$0xf]
    %v360 = vld [vmem:[%s351 + $0x20] sm:$0xf]
    %v361 = vld [vmem:[%s351 + $0x24] sm:$0xf]
    %v362 = vld [vmem:[%s351 + $0x28] sm:$0xf]
    %v363 = vld [vmem:[%s351 + $0x2c] sm:$0xf]
    %v364 = vld [vmem:[%s351 + $0x30] sm:$0xf]
    %v365 = vld [vmem:[%s351 + $0x34] sm:$0xf]
    %v366 = vld [vmem:[%s351 + $0x38] sm:$0xf]
    %v367 = vld [vmem:[%s351 + $0x3c] sm:$0xf]
    %v368 = vld [vmem:[#allocation8 + $0x5] sm:$0x1]
    %v369 = vperm.slane %v368, 0
    %v386 = vunpack.c.l.b16 %v352
    %v387 = vunpack.c.l.b16 %v353
    %v388 = vunpack.c.l.b16 %v354
    %v389 = vunpack.c.l.b16 %v355
    %v390 = vunpack.c.l.b16 %v356
    %v391 = vunpack.c.l.b16 %v357
    %v392 = vunpack.c.l.b16 %v358
    %v393 = vunpack.c.l.b16 %v359
    %v394 = vunpack.c.l.b16 %v360
    %v395 = vunpack.c.l.b16 %v361
    %v396 = vunpack.c.l.b16 %v362
    %v397 = vunpack.c.l.b16 %v363
    %v398 = vunpack.c.l.b16 %v364
    %v399 = vunpack.c.l.b16 %v365
    %v400 = vunpack.c.l.b16 %v366
    %v401 = vunpack.c.l.b16 %v367
    %v402 = vpack.c.b16 %v387, %v386
    %v403 = vpack.c.b16 %v389, %v388
    %v404 = vpack.c.b16 %v391, %v390
    %v405 = vpack.c.b16 %v393, %v392
    %v406 = vpack.c.b16 %v395, %v394
    %v407 = vpack.c.b16 %v397, %v396
    %v408 = vpack.c.b16 %v399, %v398
    %v409 = vpack.c.b16 %v401, %v400
    %418 = vmatpush.bf16.msra.mxu0 %v409
    %419 = vmatpush.bf16.msra.mxu0 %v408
    %420 = vmatpush.bf16.msra.mxu0 %v407
    %421 = vmatpush.bf16.msra.mxu0 %v406
    %422 = vmatpush.bf16.msra.mxu0 %v405
    %423 = vmatpush.bf16.msra.mxu0 %v404
    %424 = vmatpush.bf16.msra.mxu0 %v403
    %425 = vmatpush.bf16.msra.mxu0 %v402
    %426 = vmatmul.bf16.gmra.mxu0 %v350
    %v427 = vpop.f32.mrf.mxu0
    %v428 = vadd.f32 %v369, %v427
    %v429 = vpop.f32.mrf.mxu0
    %430 = vdwg.mxu0
    %v431 = vmax.f32 %v428, 0.0
    %v432 = vpack.c.bf16 %v431, %v431
    %s433 = scalar_lea.vmem [#allocation7], 192
    %v434 = vld [vmem:[%s433] sm:$0xf]
    %v435 = vld [vmem:[%s433 + $0x4] sm:$0xf]
    %v436 = vld [vmem:[%s433 + $0x8] sm:$0xf]
    %v437 = vld [vmem:[%s433 + $0xc] sm:$0xf]
    %v438 = vld [vmem:[%s433 + $0x10] sm:$0xf]
    %v439 = vld [vmem:[%s433 + $0x14] sm:$0xf]
    %v440 = vld [vmem:[%s433 + $0x18] sm:$0xf]
    %v441 = vld [vmem:[%s433 + $0x1c] sm:$0xf]
    %v442 = vld [vmem:[%s433 + $0x20] sm:$0xf]
    %v443 = vld [vmem:[%s433 + $0x24] sm:$0xf]
    %v444 = vld [vmem:[%s433 + $0x28] sm:$0xf]
    %v445 = vld [vmem:[%s433 + $0x2c] sm:$0xf]
    %v446 = vld [vmem:[%s433 + $0x30] sm:$0xf]
    %v447 = vld [vmem:[%s433 + $0x34] sm:$0xf]
    %v448 = vld [vmem:[%s433 + $0x38] sm:$0xf]
    %v449 = vld [vmem:[%s433 + $0x3c] sm:$0xf]
    %v450 = vld [vmem:[#allocation8 + $0x6] sm:$0x1]
    %v451 = vperm.slane %v450, 0
    %v468 = vunpack.c.l.b16 %v434
    %v469 = vunpack.c.l.b16 %v435
    %v470 = vunpack.c.l.b16 %v436
    %v471 = vunpack.c.l.b16 %v437
    %v472 = vunpack.c.l.b16 %v438
    %v473 = vunpack.c.l.b16 %v439
    %v474 = vunpack.c.l.b16 %v440
    %v475 = vunpack.c.l.b16 %v441
    %v476 = vunpack.c.l.b16 %v442
    %v477 = vunpack.c.l.b16 %v443
    %v478 = vunpack.c.l.b16 %v444
    %v479 = vunpack.c.l.b16 %v445
    %v480 = vunpack.c.l.b16 %v446
    %v481 = vunpack.c.l.b16 %v447
    %v482 = vunpack.c.l.b16 %v448
    %v483 = vunpack.c.l.b16 %v449
    %v484 = vpack.c.b16 %v469, %v468
    %v485 = vpack.c.b16 %v471, %v470
    %v486 = vpack.c.b16 %v473, %v472
    %v487 = vpack.c.b16 %v475, %v474
    %v488 = vpack.c.b16 %v477, %v476
    %v489 = vpack.c.b16 %v479, %v478
    %v490 = vpack.c.b16 %v481, %v480
    %v491 = vpack.c.b16 %v483, %v482
    %500 = vmatpush.bf16.msra.mxu0 %v491
    %501 = vmatpush.bf16.msra.mxu0 %v490
    %502 = vmatpush.bf16.msra.mxu0 %v489
    %503 = vmatpush.bf16.msra.mxu0 %v488
    %504 = vmatpush.bf16.msra.mxu0 %v487
    %505 = vmatpush.bf16.msra.mxu0 %v486
    %506 = vmatpush.bf16.msra.mxu0 %v485
    %507 = vmatpush.bf16.msra.mxu0 %v484
    %508 = vmatmul.bf16.gmra.mxu0 %v432
    %v509 = vpop.f32.mrf.mxu0
    %v510 = vadd.f32 %v451, %v509
    %v511 = vpop.f32.mrf.mxu0
    %512 = vdwg.mxu0
    %v513 = vtanh.pop %v510
    %514 = vst [vmem:[#allocation10] sm:$0xff] %v513
    // Predicated region
    $region34: #{tpu_custom_call.1} parent=1 // pred_check
      _
    $region35: #{tpu_custom_call.1} parent=1 // pred_check_branch
      %516 = sbr.rel (0) target = $region37
    $region36: #{tpu_custom_call.1} parent=1 // pred_region
      %518 = vsyncadd [#allocation4], 0
      %s520 = sshll.u32 [#allocation10], 4
      %s521 = int_to_ptr.vmem [resolvable:$true] %s520
      %s522 = sshll.u32 %s4, 4
      %s523 = int_to_ptr.hbm [resolvable:$true] %s522
      %525 = dma.vmem_to_hbm [thread:$0]  %s521, 128, %s523, [#allocation4]
    $region37: #{tpu_custom_call.1} parent=1 // pred_fallthru
      _
    // Predicated region
    $region38: #{tpu_custom_call.1} parent=1 // pred_check
      _
    $region39: #{tpu_custom_call.1} parent=1 // pred_check_branch
      %527 = sbr.rel (0) target = $region41
    $region40: #{tpu_custom_call.1} parent=1 // pred_region
      %529 = dma.done [#allocation4], 128
    $region41: #{tpu_custom_call.1} parent=1 // pred_fallthru
      _
    %530 = vsyncpa [#allocation3], 1
    %531 = vsyncpa [#allocation6], 1
    %532 = vsyncpa [#allocation9], 1
    %533 = vsyncpa [#allocation4], 1

</llo_original>
